<compile_context>
chip_gen: v5e
topology: v5e:2x2
jax: 0.10.0
libtpu: 0.0.40
codegen_flags: <defaults>
</compile_context>

<pallas_src>
import jax
import jax.numpy as jnp
from jax import lax
from jax.experimental import pallas as pl
from jax.experimental.pallas import tpu as pltpu


_LANE = 128


def _erf_kernel(x_ref, o_ref):
    # Elementwise erf on the current VMEM tile.  Compute in f32 (matches torch's
    # half-precision erf, which evaluates in float32 and rounds) and cast back.
    x = x_ref[...]
    o_ref[...] = lax.erf(x.astype(jnp.float32)).astype(o_ref.dtype)


def _block_params():
    """Per-generation (target_block_bytes, vmem_limit_bytes)."""
    try:
        kind = jax.devices()[0].device_kind.lower()
    except Exception:
        kind = ""
    if "v7" in kind:
        # 64 MiB physical VMEM/TC: 4 x 8 MiB double-buffers (32 MiB) + headroom.
        return 8 << 20, 48 << 20
    if "v6" in kind:
        # 128 MiB physical VMEM; raise scoped limit well above the 32 MiB default.
        return 8 << 20, 64 << 20
    # v5e / unknown generation: conservative (v5e scoped default is only 16 MiB,
    # so the explicit 32 MiB limit is still required for 16 MiB of buffers).
    return 4 << 20, 32 << 20


def _sublane_multiple(dtype):
    """Packed sublane multiple of the dtype: 8 (f32), 16 (bf16/f16), 32 (8-bit)."""
    bits = jnp.dtype(dtype).itemsize * 8
    return max(8, 256 // max(bits, 1))


def _lane_dense_cols(n):
    """Widest lane-dense width (multiple of 128) dividing n exactly, else None."""
    for cols in (8192, 4096, 2048, 1024, 512, 256, 128):
        if n % cols == 0:
            return cols
    return None


def _erf_2d(x2, block_bytes, vmem_limit):
    """Lane-dense tiled erf over a (rows, cols) view with cols % 128 == 0."""
    rows, cols = x2.shape
    itemsize = jnp.dtype(x2.dtype).itemsize
    sub = _sublane_multiple(x2.dtype)
    total_bytes = rows * cols * itemsize

    # Bytes-derived block height, capped so the grid keeps >= 8 steps for any
    # array above ~1 MiB (pipelining + v7x megacore split).
    br_bytes = max(1, block_bytes // (cols * itemsize))
    min_steps = 8 if total_bytes >= (1 << 20) else 2
    br_steps = -(-rows // min_steps)
    br = min(br_bytes, br_steps)
    if br >= rows:
        br = rows                                  # full extent: always legal
    else:
        br = max(sub, (br // sub) * sub)           # dtype-native sublane multiple
        if br >= rows:
            br = rows

    grid = (pl.cdiv(rows, br),)
    return pl.pallas_call(
        _erf_kernel,
        out_shape=jax.ShapeDtypeStruct((rows, cols), x2.dtype),
        grid_spec=pltpu.PrefetchScalarGridSpec(
            num_scalar_prefetch=0,
            grid=grid,
            in_specs=[pl.BlockSpec((br, cols), lambda i: (i, 0))],
            out_specs=pl.BlockSpec((br, cols), lambda i: (i, 0)),
        ),
        compiler_params=pltpu.CompilerParams(
            dimension_semantics=("parallel",),
            vmem_limit_bytes=vmem_limit,
        ),
    )(x2)


def _erf_small(x1, vmem_limit):
    """Single-block erf for a tiny flat array (tail / sub-1024-element inputs)."""
    n = x1.shape[0]
    out = pl.pallas_call(
        _erf_kernel,
        out_shape=jax.ShapeDtypeStruct((1, n), x1.dtype),
        compiler_params=pltpu.CompilerParams(vmem_limit_bytes=vmem_limit),
    )(x1.reshape(1, n))
    return out.reshape(n)


def pallas_erf(x: jax.Array) -> jax.Array:
    """Elementwise erf via Pallas TPU kernels (matches torch.erf semantics)."""
    if not jnp.issubdtype(x.dtype, jnp.floating):
        raise TypeError(f"erf requires a floating dtype, got {x.dtype}")

    orig_shape = x.shape
    orig_dtype = x.dtype
    n = x.size
    if n == 0:
        return x

    # TPU has no native f64: compute in f32 and cast back.
    if orig_dtype == jnp.float64:
        x = x.astype(jnp.float32)

    block_bytes, vmem_limit = _block_params()
    cols = _lane_dense_cols(n)

    if cols is not None:
        # Common path: exact lane-dense re-factorization, zero padding.
        out_flat = _erf_2d(x.reshape(n // cols, cols),
                           block_bytes, vmem_limit).reshape(-1)
    else:
        # Ragged path: run the multiple-of-1024 prefix through the lane-dense
        # kernel, and only the <1024-element tail through a tiny single block.
        x_flat = x.reshape(-1)
        n_main = (n // 1024) * 1024
        if n_main > 0:
            cols_main = _lane_dense_cols(n_main)
            main = _erf_2d(x_flat[:n_main].reshape(n_main // cols_main, cols_main),
                           block_bytes, vmem_limit).reshape(-1)
            tail = _erf_small(x_flat[n_main:], vmem_limit)
            out_flat = jnp.concatenate([main, tail], axis=0)
        else:
            out_flat = _erf_small(x_flat, vmem_limit)

    out = out_flat.reshape(orig_shape)
    if out.dtype != orig_dtype:
        out = out.astype(orig_dtype)
    return out


if __name__ == "__main__":
    key = jax.random.PRNGKey(0)

    # Small NCHW-like input consistent with the module's typical use.
    x = jax.random.normal(key, (2, 4, 16, 16), dtype=jnp.float32) * 2.0
    y = pallas_erf(x)
    jax.block_until_ready(y)
    y_ref = lax.erf(x)
    assert y.shape == x.shape and y.dtype == x.dtype
    assert jnp.allclose(y, y_ref, atol=1e-6, rtol=1e-6)

    # Ragged (non-multiple-of-128 element count) path.
    x_odd = jax.random.normal(jax.random.PRNGKey(1), (1000,), dtype=jnp.float32)
    y_odd = pallas_erf(x_odd)
    jax.block_until_ready(y_odd)
    assert y_odd.shape == x_odd.shape and y_odd.dtype == x_odd.dtype
    assert jnp.allclose(y_odd, lax.erf(x_odd), atol=1e-6, rtol=1e-6)

    # Ragged path with a lane-dense prefix + tiny tail (1024*5 + 300 elements).
    x_mix = jax.random.normal(jax.random.PRNGKey(2), (5420,), dtype=jnp.float32)
    y_mix = pallas_erf(x_mix)
    jax.block_until_ready(y_mix)
    assert jnp.allclose(y_mix, lax.erf(x_mix), atol=1e-6, rtol=1e-6)

    # bf16 input: kernel computes in f32 and rounds back (torch semantics).
    x_bf = (jax.random.normal(jax.random.PRNGKey(3), (2, 8, 32)) * 2.0).astype(jnp.bfloat16)
    y_bf = pallas_erf(x_bf)
    jax.block_until_ready(y_bf)
    assert y_bf.dtype == jnp.bfloat16
    assert jnp.allclose(y_bf.astype(jnp.float32),
                        lax.erf(x_bf.astype(jnp.float32)), atol=2e-2, rtol=2e-2)

    print("KERNEL_OK")
</pallas_src>

<mosaic_0001>
module attributes {stable_mosaic.version = 11 : i64} {
  func.func @_erf_kernel(%arg0: i32, %arg1: memref<1x2048xf32, #tpu.memory_space<vmem>>, %arg2: memref<1x2048xf32, #tpu.memory_space<vmem>>) attributes {dimension_semantics = [#tpu.dimension_semantics<parallel>], iteration_bounds = array<i64: 1>, scalar_prefetch = 0 : i64, scratch_operands = 0 : i64, tpu.core_type = #tpu.core_type<tc>, window_params = [{transform_indices = @transform_0, window_bounds = array<i64: 1, 2048>}, {transform_indices = @transform_1, window_bounds = array<i64: 1, 2048>}]} {
    %c0 = arith.constant 0 : index
    %c0_0 = arith.constant 0 : index
    %0 = vector.load %arg1[%c0, %c0_0] : memref<1x2048xf32, #tpu.memory_space<vmem>>, vector<1x2048xf32>
    %1 = math.erf %0 : vector<1x2048xf32>
    %c0_1 = arith.constant 0 : index
    %c0_2 = arith.constant 0 : index
    %2 = vector.load %arg2[%c0_1, %c0_2] : memref<1x2048xf32, #tpu.memory_space<vmem>>, vector<1x2048xf32>
    tpu.vector_store %arg2[%c0_1, %c0_2], %1 {strides = array<i32>} : memref<1x2048xf32, #tpu.memory_space<vmem>>, vector<1x2048xf32>,
    return
  }
  func.func @transform_0(%arg0: i32) -> (i32, i32) {
    %c0_i32 = arith.constant 0 : i32
    %c0_i32_0 = arith.constant 0 : i32
    return %arg0, %c0_i32 : i32, i32
  }
  func.func @transform_1(%arg0: i32) -> (i32, i32) {
    %c0_i32 = arith.constant 0 : i32
    %c0_i32_0 = arith.constant 0 : i32
    return %arg0, %c0_i32 : i32, i32
  }
}

</mosaic_0001>

<llo_original>
// kernel: tpu_custom_call.1
$region0: #{tpu_custom_call.1}
  #allocation0 [shape = 'u32[]', space=smem, size = 0x4, offset = 0x4, fixed_abs, tag = 'smem constant byte address 0x4 - core index']
  #allocation1 [shape = 'u32[72,128]{1,0:T(1,128)}', space=vmem, size = 0x9000, scoped, tag = 'internal scratch']
  %s0 = inlined_call_operand.hbm [shape: f32[1,2048], index: 0, kind: input, shape index: {}]
  %s1 = inlined_call_operand.hbm [shape: f32[1,2048], index: 1, kind: output, shape index: {}]
  %s2 = sld [smem:[#allocation0]]
  $region18: #{tpu_custom_call.1} parent=0
    _
  %s4 = ssub.s32 1, %s2
  %s5 = scalar_select 0, %s4, %s2
  $region1: #{tpu_custom_call.1} parent=0
    #allocation2 [shape = 'u8[8192]{0}', space=vmem, size = 0x2000, scoped, tag = 'input window, operand 0, single buffered']
    #allocation3 [shape = 's32[1]{0}', space=sflag, size = 0x4, scoped, tag = 'scoped memory for tpu_custom_call.1']
    #allocation4 [shape = 's32[1]{0}', space=sflag, size = 0x4, scoped, tag = 'scoped memory for tpu_custom_call.1']
    #allocation5 [shape = 'u8[8192]{0}', space=vmem, size = 0x2000, scoped, tag = 'output window, operand 0, single buffered']
    %6 = vsyncpa [#allocation3], 0
    %7 = vsyncpa [#allocation4], 0
    // Predicated region
    $region2: #{tpu_custom_call.1} parent=1 // pred_check
      _
    $region3: #{tpu_custom_call.1} parent=1 // pred_check_branch
      %9 = sbr.rel (0) target = $region5
    $region4: #{tpu_custom_call.1} parent=1 // pred_region
      %11 = vsyncadd [#allocation3], 0
      %s13 = sshll.u32 %s0, 4
      %s14 = int_to_ptr.hbm [resolvable:$true] %s13
      %s15 = sshll.u32 [#allocation2], 4
      %s16 = int_to_ptr.vmem [resolvable:$true] %s15
      %18 = dma.hbm_to_vmem [thread:$0]  %s14, 256, %s16, [#allocation3]
    $region5: #{tpu_custom_call.1} parent=1 // pred_fallthru
      _
    // Predicated region
    $region6: #{tpu_custom_call.1} parent=1 // pred_check
      _
    $region7: #{tpu_custom_call.1} parent=1 // pred_check_branch
      %20 = sbr.rel (0) target = $region9
    $region8: #{tpu_custom_call.1} parent=1 // pred_region
      %22 = dma.done [#allocation3], 256
    $region9: #{tpu_custom_call.1} parent=1 // pred_fallthru
      _
    %v23 = vld [vmem:[#allocation2] sm:$0xff]
    %v24 = vld [vmem:[#allocation2 + $0x8] sm:$0xff]
    %v25 = vmul.f32 %v23, %v23
    %v26 = vmin.f32 16.0, %v25
    %v27 = vmul.f32 %v26, 2.1237322e-06
    %v28 = vadd.f32 %v27, 0.00028619796
    %v29 = vmul.f32 %v26, %v28
    %v30 = vadd.f32 %v29, 0.0036580483
    %v31 = vmul.f32 %v26, %v30
    %v32 = vadd.f32 %v31, 0.05243302
    %v33 = vmul.f32 %v26, %v32
    %v34 = vadd.f32 %v33, 0.18741608
    %v35 = vmul.f32 %v26, %v34
    %v36 = vadd.f32 %v35, 1.1283791
    %v37 = vmul.f32 %v23, %v36
    %v38 = vmul.f32 %v26, 3.8918573e-05
    %v39 = vadd.f32 %v38, 0.001143296
    %v40 = vmul.f32 %v26, %v39
    %v41 = vadd.f32 %v40, 0.014752088
    %v42 = vmul.f32 %v26, %v41
    %v43 = vadd.f32 %v42, 0.112945676
    %v44 = vmul.f32 %v26, %v43
    %v45 = vadd.f32 %v44, 0.4994258
    %v46 = vmul.f32 %v26, %v45
    %v47 = vadd.f32 %v46, 1.0
    %v48 = vrcp.pop %v47
    %v49 = vmul.f32 %v47, %v48
    %v50 = vsub.f32 1.0, %v49
    %v51 = vmul.f32 %v48, %v50
    %v52 = vadd.f32 %v48, %v51
    %vm53 = vweird.f32 %v47
    %vm54 = vweird.f32 %v48
    %vm55 = vmor %vm53, %vm54
    %v56 = vsel %vm55, %v48, %v52
    %v57 = vand.u32 2147483647, %v47
    %vm58 = vcmp.eq.f32.partialorder %v57, 8.507059e+37
    %v59 = vand.u32 %v47, 2147483648
    %v60 = vor.u32 1.1754944e-38, %v59
    %v61 = vsel %vm58, %v60, %v56
    %v62 = vmul.f32 %v37, %v61
    %v63 = vmin.f32 %v62, 1.0
    %v64 = vmax.f32 %v63, -1.0
    %v65 = vmul.f32 %v24, %v24
    %v66 = vmin.f32 16.0, %v65
    %v67 = vmul.f32 %v66, 2.1237322e-06
    %v68 = vadd.f32 %v67, 0.00028619796
    %v69 = vmul.f32 %v66, %v68
    %v70 = vadd.f32 %v69, 0.0036580483
    %v71 = vmul.f32 %v66, %v70
    %v72 = vadd.f32 %v71, 0.05243302
    %v73 = vmul.f32 %v66, %v72
    %v74 = vadd.f32 %v73, 0.18741608
    %v75 = vmul.f32 %v66, %v74
    %v76 = vadd.f32 %v75, 1.1283791
    %v77 = vmul.f32 %v24, %v76
    %v78 = vmul.f32 %v66, 3.8918573e-05
    %v79 = vadd.f32 %v78, 0.001143296
    %v80 = vmul.f32 %v66, %v79
    %v81 = vadd.f32 %v80, 0.014752088
    %v82 = vmul.f32 %v66, %v81
    %v83 = vadd.f32 %v82, 0.112945676
    %v84 = vmul.f32 %v66, %v83
    %v85 = vadd.f32 %v84, 0.4994258
    %v86 = vmul.f32 %v66, %v85
    %v87 = vadd.f32 %v86, 1.0
    %v88 = vrcp.pop %v87
    %v89 = vmul.f32 %v87, %v88
    %v90 = vsub.f32 1.0, %v89
    %v91 = vmul.f32 %v88, %v90
    %v92 = vadd.f32 %v88, %v91
    %vm93 = vweird.f32 %v87
    %vm94 = vweird.f32 %v88
    %vm95 = vmor %vm93, %vm94
    %v96 = vsel %vm95, %v88, %v92
    %v97 = vand.u32 2147483647, %v87
    %vm98 = vcmp.eq.f32.partialorder %v97, 8.507059e+37
    %v99 = vand.u32 %v87, 2147483648
    %v100 = vor.u32 1.1754944e-38, %v99
    %v101 = vsel %vm98, %v100, %v96
    %v102 = vmul.f32 %v77, %v101
    %v103 = vmin.f32 %v102, 1.0
    %v104 = vmax.f32 %v103, -1.0
    %105 = vst [vmem:[#allocation5] sm:$0xff] %v64
    %106 = vst [vmem:[#allocation5 + $0x8] sm:$0xff] %v104
    // Predicated region
    $region10: #{tpu_custom_call.1} parent=1 // pred_check
      _
    $region11: #{tpu_custom_call.1} parent=1 // pred_check_branch
      %108 = sbr.rel (0) target = $region13
    $region12: #{tpu_custom_call.1} parent=1 // pred_region
      %110 = vsyncadd [#allocation4], 0
      %s112 = sshll.u32 [#allocation5], 4
      %s113 = int_to_ptr.vmem [resolvable:$true] %s112
      %s114 = sshll.u32 %s1, 4
      %s115 = int_to_ptr.hbm [resolvable:$true] %s114
      %117 = dma.vmem_to_hbm [thread:$0]  %s113, 256, %s115, [#allocation4]
    $region13: #{tpu_custom_call.1} parent=1 // pred_fallthru
      _
    // Predicated region
    $region14: #{tpu_custom_call.1} parent=1 // pred_check
      _
    $region15: #{tpu_custom_call.1} parent=1 // pred_check_branch
      %119 = sbr.rel (0) target = $region17
    $region16: #{tpu_custom_call.1} parent=1 // pred_region
      %121 = dma.done [#allocation4], 256
    $region17: #{tpu_custom_call.1} parent=1 // pred_fallthru
      _
    %122 = vsyncpa [#allocation3], 1
    %123 = vsyncpa [#allocation4], 1

</llo_original>
